<compile_context>
chip_gen: v7x
topology: tpu7x:2x2x1
jax: 0.10.0
libtpu: 0.0.40
codegen_flags: <defaults>
</compile_context>

<pallas_src>
import jax
import jax.numpy as jnp
from jax.experimental import pallas as pl
from jax.experimental.pallas import tpu as pltpu


def _residual_conv1x1_kernel(x_ref, w_ref, b_ref, o_ref):
    # x_ref / o_ref: (Bn, C, T) tile — C in sublanes, T (pixels) in lanes.
    # w_ref: (C, C) in the activation dtype (resident); b_ref: (C, 1) f32 (resident).
    w = w_ref[...]
    b = b_ref[...]
    C = w.shape[0]
    Bn = x_ref.shape[0]
    use_mxu = C >= 32

    for bi in range(Bn):                       # small static unroll over the batch block
        x = x_ref[bi]                          # (C, T), activation dtype
        acc = x.astype(jnp.float32) + b        # residual + bias, f32 accumulate
        if use_mxu:
            # (C, C) x (C, T) contraction on the MXU; inputs stay in activation
            # dtype (bf16 stays bf16), accumulation forced to f32.
            acc = acc + jnp.dot(w, x, preferred_element_type=jnp.float32)
        else:
            # Tiny C (< 32): a handful of broadcast FMAs on the VPU beats a
            # degenerate CxC MXU matmul; hidden under DMA anyway (mem-bound).
            xf = x.astype(jnp.float32)
            wf = w.astype(jnp.float32)
            for i in range(C):
                acc = acc + wf[:, i:i + 1] * xf[i:i + 1, :]
        o_ref[bi] = acc.astype(o_ref.dtype)


def _plan_tiles(N, C, HW, itemsize, target_bytes, max_batch_block=8):
    """Pick (batch_block, tile_hw) so one grid step moves ~target_bytes of input."""
    c_pad = ((C + 7) // 8) * 8                 # physical sublane padding
    col_bytes = c_pad * itemsize               # bytes per pixel column (one image)
    per_image = col_bytes * HW

    if per_image >= target_bytes:
        # Tile within a single image along H*W (lane) — multiple of 128 or full HW.
        bn = 1
        t = (target_bytes // col_bytes) // 128 * 128
        t = max(128, t)
        tile_hw = HW if t >= HW else t
    else:
        # Whole image fits well under the target: block several images per step.
        tile_hw = HW
        bn = int(max(1, min(N, max_batch_block, target_bytes // per_image)))
    return bn, tile_hw, c_pad


def residual_pointwise_conv(x_nchw, weight, bias, *, target_bytes_per_step=1536 * 1024):
    """out = x + conv1x1(x; weight, bias); x NCHW, weight (C_out=C, C_in=C), bias (C,)."""
    N, C, H, W = x_nchw.shape
    HW = H * W
    itemsize = jnp.dtype(x_nchw.dtype).itemsize

    # Free views — NCHW is already contiguous as (N, C, H*W); no transpose, no pad.
    x3 = x_nchw.reshape(N, C, HW)
    w = weight.astype(x_nchw.dtype)            # keep MXU operands in activation dtype
    b = bias.reshape(C, 1).astype(jnp.float32)

    bn, tile_hw, c_pad = _plan_tiles(N, C, HW, itemsize, target_bytes_per_step)
    grid = (pl.cdiv(N, bn), pl.cdiv(HW, tile_hw))

    # v7x has 2 TensorCores: expose >= 2 "parallel" steps when there is real work.
    total_bytes = N * c_pad * HW * itemsize
    if grid[0] * grid[1] == 1 and total_bytes >= (2 << 20):
        if bn > 1:
            bn = (bn + 1) // 2
        elif HW > 128:
            half = (HW + 1) // 2
            tile_hw = max(128, ((half + 127) // 128) * 128)
        grid = (pl.cdiv(N, bn), pl.cdiv(HW, tile_hw))

    # VMEM budget: double-buffered x and out blocks, double-buffered resident
    # params (BlockSpec double-buffers every input), f32 working copies, plus
    # headroom; cap at 48 MiB to stay safely under v7x's 64 MiB physical VMEM.
    blk_bytes = bn * c_pad * tile_hw * itemsize
    w_bytes = c_pad * (((C + 127) // 128) * 128) * jnp.dtype(w.dtype).itemsize
    acc_bytes = bn * c_pad * tile_hw * 4
    need = 4 * blk_bytes + 2 * w_bytes + acc_bytes + (2 << 20)
    vmem_bytes = int(min(48 << 20, max(16 << 20, need)))

    cost = pl.CostEstimate(
        flops=int(2 * N * HW * C * C + 2 * N * HW * C),
        transcendentals=0,
        bytes_accessed=int(2 * N * C * HW * itemsize
                           + C * C * jnp.dtype(w.dtype).itemsize + C * 4),
    )

    out3 = pl.pallas_call(
        _residual_conv1x1_kernel,
        out_shape=jax.ShapeDtypeStruct((N, C, HW), x_nchw.dtype),
        grid_spec=pltpu.PrefetchScalarGridSpec(
            num_scalar_prefetch=0,
            grid=grid,
            in_specs=[
                pl.BlockSpec((bn, C, tile_hw), lambda n, j: (n, 0, j)),  # x tile
                pl.BlockSpec((C, C), lambda n, j: (0, 0)),               # weight (resident)
                pl.BlockSpec((C, 1), lambda n, j: (0, 0)),               # bias   (resident)
            ],
            out_specs=pl.BlockSpec((bn, C, tile_hw), lambda n, j: (n, 0, j)),
        ),
        compiler_params=pltpu.CompilerParams(
            dimension_semantics=("parallel", "parallel"),
            vmem_limit_bytes=vmem_bytes,
        ),
        cost_estimate=cost,
    )(x3, w, b)

    return out3.reshape(N, C, H, W)


if __name__ == "__main__":
    key = jax.random.PRNGKey(0)
    kx, kw, kb = jax.random.split(key, 3)

    N, C, H, W = 2, 4, 16, 16
    x = jax.random.normal(kx, (N, C, H, W), dtype=jnp.float32)
    # Deterministic synthetic params mimicking Conv2d(C, C, kernel_size=1)
    weight = jax.random.normal(kw, (C, C), dtype=jnp.float32) * 0.1
    bias = jax.random.normal(kb, (C,), dtype=jnp.float32) * 0.1

    out = residual_pointwise_conv(x, weight, bias)
    out = jax.block_until_ready(out)

    # Pure-JAX reference: x + conv1x1(x)
    ref = x + jnp.einsum("nchw,oc->nohw", x, weight) + bias.reshape(1, C, 1, 1)
    assert out.shape == x.shape and out.dtype == x.dtype
    assert jnp.allclose(out, ref, atol=1e-5, rtol=1e-5)

    print("KERNEL_OK")
</pallas_src>

<mosaic_0001>
module attributes {stable_mosaic.version = 11 : i64} {
  func.func @_residual_conv1x1_kernel(%arg0: i32, %arg1: i32, %arg2: memref<2x4x256xf32, #tpu.memory_space<vmem>>, %arg3: memref<4x4xf32, #tpu.memory_space<vmem>>, %arg4: memref<4x1xf32, #tpu.memory_space<vmem>>, %arg5: memref<2x4x256xf32, #tpu.memory_space<vmem>>) attributes {dimension_semantics = [#tpu.dimension_semantics<parallel>, #tpu.dimension_semantics<parallel>], iteration_bounds = array<i64: 1, 1>, scalar_prefetch = 0 : i64, scratch_operands = 0 : i64, tpu.core_type = #tpu.core_type<tc>, window_params = [{transform_indices = @transform_0, window_bounds = array<i64: 2, 4, 256>}, {pipeline_mode = #tpu.pipeline_mode<synchronous>, transform_indices = @transform_1, window_bounds = array<i64: 4, 4>}, {pipeline_mode = #tpu.pipeline_mode<synchronous>, transform_indices = @transform_2, window_bounds = array<i64: 4, 1>}, {transform_indices = @transform_3, window_bounds = array<i64: 2, 4, 256>}]} {
    %c0 = arith.constant 0 : index
    %c0_0 = arith.constant 0 : index
    %0 = vector.load %arg3[%c0, %c0_0] : memref<4x4xf32, #tpu.memory_space<vmem>>, vector<4x4xf32>
    %c0_1 = arith.constant 0 : index
    %c0_2 = arith.constant 0 : index
    %1 = vector.load %arg4[%c0_1, %c0_2] : memref<4x1xf32, #tpu.memory_space<vmem>>, vector<4x1xf32>
    %c0_3 = arith.constant 0 : index
    %c0_4 = arith.constant 0 : index
    %c0_5 = arith.constant 0 : index
    %2 = vector.load %arg2[%c0_3, %c0_4, %c0_5] : memref<2x4x256xf32, #tpu.memory_space<vmem>>, vector<1x4x256xf32>
    %3 = vector.shape_cast %2 : vector<1x4x256xf32> to vector<4x256xf32>
    %4 = vector.broadcast %1 : vector<4x1xf32> to vector<4x256xf32>
    %5 = arith.addf %3, %4 : vector<4x256xf32>
    %6 = vector.extract_strided_slice %0 {offsets = [0, 0], sizes = [4, 1], strides = [1, 1]} : vector<4x4xf32> to vector<4x1xf32>
    %7 = vector.extract_strided_slice %3 {offsets = [0, 0], sizes = [1, 256], strides = [1, 1]} : vector<4x256xf32> to vector<1x256xf32>
    %8 = vector.broadcast %6 : vector<4x1xf32> to vector<4x256xf32>
    %9 = vector.broadcast %7 : vector<1x256xf32> to vector<4x256xf32>
    %10 = arith.mulf %8, %9 : vector<4x256xf32>
    %11 = arith.addf %5, %10 : vector<4x256xf32>
    %12 = vector.extract_strided_slice %0 {offsets = [0, 1], sizes = [4, 1], strides = [1, 1]} : vector<4x4xf32> to vector<4x1xf32>
    %13 = vector.extract_strided_slice %3 {offsets = [1, 0], sizes = [1, 256], strides = [1, 1]} : vector<4x256xf32> to vector<1x256xf32>
    %14 = vector.broadcast %12 : vector<4x1xf32> to vector<4x256xf32>
    %15 = vector.broadcast %13 : vector<1x256xf32> to vector<4x256xf32>
    %16 = arith.mulf %14, %15 : vector<4x256xf32>
    %17 = arith.addf %11, %16 : vector<4x256xf32>
    %18 = vector.extract_strided_slice %0 {offsets = [0, 2], sizes = [4, 1], strides = [1, 1]} : vector<4x4xf32> to vector<4x1xf32>
    %19 = vector.extract_strided_slice %3 {offsets = [2, 0], sizes = [1, 256], strides = [1, 1]} : vector<4x256xf32> to vector<1x256xf32>
    %20 = vector.broadcast %18 : vector<4x1xf32> to vector<4x256xf32>
    %21 = vector.broadcast %19 : vector<1x256xf32> to vector<4x256xf32>
    %22 = arith.mulf %20, %21 : vector<4x256xf32>
    %23 = arith.addf %17, %22 : vector<4x256xf32>
    %24 = vector.extract_strided_slice %0 {offsets = [0, 3], sizes = [4, 1], strides = [1, 1]} : vector<4x4xf32> to vector<4x1xf32>
    %25 = vector.extract_strided_slice %3 {offsets = [3, 0], sizes = [1, 256], strides = [1, 1]} : vector<4x256xf32> to vector<1x256xf32>
    %26 = vector.broadcast %24 : vector<4x1xf32> to vector<4x256xf32>
    %27 = vector.broadcast %25 : vector<1x256xf32> to vector<4x256xf32>
    %28 = arith.mulf %26, %27 : vector<4x256xf32>
    %29 = arith.addf %23, %28 : vector<4x256xf32>
    %c0_6 = arith.constant 0 : index
    %c0_7 = arith.constant 0 : index
    %c0_8 = arith.constant 0 : index
    %30 = vector.load %arg5[%c0_6, %c0_7, %c0_8] : memref<2x4x256xf32, #tpu.memory_space<vmem>>, vector<1x4x256xf32>
    %31 = vector.shape_cast %30 : vector<1x4x256xf32> to vector<4x256xf32>
    %32 = vector.shape_cast %29 : vector<4x256xf32> to vector<1x4x256xf32>
    tpu.vector_store %arg5[%c0_6, %c0_7, %c0_8], %32 {strides = array<i32>} : memref<2x4x256xf32, #tpu.memory_space<vmem>>, vector<1x4x256xf32>,
    %c1 = arith.constant 1 : index
    %c0_9 = arith.constant 0 : index
    %c0_10 = arith.constant 0 : index
    %33 = vector.load %arg2[%c1, %c0_9, %c0_10] : memref<2x4x256xf32, #tpu.memory_space<vmem>>, vector<1x4x256xf32>
    %34 = vector.shape_cast %33 : vector<1x4x256xf32> to vector<4x256xf32>
    %35 = vector.broadcast %1 : vector<4x1xf32> to vector<4x256xf32>
    %36 = arith.addf %34, %35 : vector<4x256xf32>
    %37 = vector.extract_strided_slice %0 {offsets = [0, 0], sizes = [4, 1], strides = [1, 1]} : vector<4x4xf32> to vector<4x1xf32>
    %38 = vector.extract_strided_slice %34 {offsets = [0, 0], sizes = [1, 256], strides = [1, 1]} : vector<4x256xf32> to vector<1x256xf32>
    %39 = vector.broadcast %37 : vector<4x1xf32> to vector<4x256xf32>
    %40 = vector.broadcast %38 : vector<1x256xf32> to vector<4x256xf32>
    %41 = arith.mulf %39, %40 : vector<4x256xf32>
    %42 = arith.addf %36, %41 : vector<4x256xf32>
    %43 = vector.extract_strided_slice %0 {offsets = [0, 1], sizes = [4, 1], strides = [1, 1]} : vector<4x4xf32> to vector<4x1xf32>
    %44 = vector.extract_strided_slice %34 {offsets = [1, 0], sizes = [1, 256], strides = [1, 1]} : vector<4x256xf32> to vector<1x256xf32>
    %45 = vector.broadcast %43 : vector<4x1xf32> to vector<4x256xf32>
    %46 = vector.broadcast %44 : vector<1x256xf32> to vector<4x256xf32>
    %47 = arith.mulf %45, %46 : vector<4x256xf32>
    %48 = arith.addf %42, %47 : vector<4x256xf32>
    %49 = vector.extract_strided_slice %0 {offsets = [0, 2], sizes = [4, 1], strides = [1, 1]} : vector<4x4xf32> to vector<4x1xf32>
    %50 = vector.extract_strided_slice %34 {offsets = [2, 0], sizes = [1, 256], strides = [1, 1]} : vector<4x256xf32> to vector<1x256xf32>
    %51 = vector.broadcast %49 : vector<4x1xf32> to vector<4x256xf32>
    %52 = vector.broadcast %50 : vector<1x256xf32> to vector<4x256xf32>
    %53 = arith.mulf %51, %52 : vector<4x256xf32>
    %54 = arith.addf %48, %53 : vector<4x256xf32>
    %55 = vector.extract_strided_slice %0 {offsets = [0, 3], sizes = [4, 1], strides = [1, 1]} : vector<4x4xf32> to vector<4x1xf32>
    %56 = vector.extract_strided_slice %34 {offsets = [3, 0], sizes = [1, 256], strides = [1, 1]} : vector<4x256xf32> to vector<1x256xf32>
    %57 = vector.broadcast %55 : vector<4x1xf32> to vector<4x256xf32>
    %58 = vector.broadcast %56 : vector<1x256xf32> to vector<4x256xf32>
    %59 = arith.mulf %57, %58 : vector<4x256xf32>
    %60 = arith.addf %54, %59 : vector<4x256xf32>
    %c1_11 = arith.constant 1 : index
    %c0_12 = arith.constant 0 : index
    %c0_13 = arith.constant 0 : index
    %61 = vector.load %arg5[%c1_11, %c0_12, %c0_13] : memref<2x4x256xf32, #tpu.memory_space<vmem>>, vector<1x4x256xf32>
    %62 = vector.shape_cast %61 : vector<1x4x256xf32> to vector<4x256xf32>
    %63 = vector.shape_cast %60 : vector<4x256xf32> to vector<1x4x256xf32>
    tpu.vector_store %arg5[%c1_11, %c0_12, %c0_13], %63 {strides = array<i32>} : memref<2x4x256xf32, #tpu.memory_space<vmem>>, vector<1x4x256xf32>,
    return
  }
  func.func @transform_0(%arg0: i32, %arg1: i32) -> (i32, i32, i32) {
    %c0_i32 = arith.constant 0 : i32
    %c0_i32_0 = arith.constant 0 : i32
    return %arg0, %c0_i32, %arg1 : i32, i32, i32
  }
  func.func @transform_1(%arg0: i32, %arg1: i32) -> (i32, i32) {
    %c0_i32 = arith.constant 0 : i32
    %c0_i32_0 = arith.constant 0 : i32
    %c0_i32_1 = arith.constant 0 : i32
    return %c0_i32, %c0_i32_0 : i32, i32
  }
  func.func @transform_2(%arg0: i32, %arg1: i32) -> (i32, i32) {
    %c0_i32 = arith.constant 0 : i32
    %c0_i32_0 = arith.constant 0 : i32
    %c0_i32_1 = arith.constant 0 : i32
    return %c0_i32, %c0_i32_0 : i32, i32
  }
  func.func @transform_3(%arg0: i32, %arg1: i32) -> (i32, i32, i32) {
    %c0_i32 = arith.constant 0 : i32
    %c0_i32_0 = arith.constant 0 : i32
    return %arg0, %c0_i32, %arg1 : i32, i32, i32
  }
}

</mosaic_0001>

<llo_original>
// kernel: tpu_custom_call.1
$region0: #{tpu_custom_call.1}
  #allocation0 [shape = 'u32[]', space=smem, size = 0x4, offset = 0x4, fixed_abs, tag = 'smem constant byte address 0x4 - core index']
  #allocation1 [shape = 'u32[144,128]{1,0:T(1,128)}', space=vmem, size = 0x12000, scoped, tag = 'internal scratch']
  %s0 = inlined_call_operand.hbm [shape: f32[2,4,256], index: 0, kind: input, shape index: {}]
  %s1 = inlined_call_operand.vmem [shape: f32[4,4], index: 1, kind: input, shape index: {}]
  %s2 = inlined_call_operand.vmem [shape: f32[4,1], index: 2, kind: input, shape index: {}]
  %s3 = inlined_call_operand.hbm [shape: f32[2,4,256], index: 3, kind: output, shape index: {}]
  %s4 = sld [smem:[#allocation0]]
  $region26: #{tpu_custom_call.1} parent=0
    _
  %s6 = ssub.s32 1, %s4
  %s7 = scalar_select 0, %s6, %s4
  $region1: #{tpu_custom_call.1} parent=0
    #allocation2 [shape = 'u8[8192]{0}', space=vmem, size = 0x2000, scoped, tag = 'input window, operand 0, single buffered']
    #allocation3 [shape = 's32[1]{0}', space=sflag, size = 0x4, scoped, tag = 'scoped memory for tpu_custom_call.1']
    #allocation4 [shape = 's32[1]{0}', space=sflag, size = 0x4, scoped, tag = 'scoped memory for tpu_custom_call.1']
    #allocation5 [shape = 'u8[8192]{0}', space=vmem, size = 0x2000, scoped, tag = 'output window, operand 0, single buffered']
    %8 = vsyncpa [#allocation3], 0
    %9 = vsyncpa [#allocation4], 0
    // Predicated region
    $region2: #{tpu_custom_call.1} parent=1 // pred_check
      _
    $region3: #{tpu_custom_call.1} parent=1 // pred_check_branch
      %11 = sbr.rel (0) target = $region5
    $region4: #{tpu_custom_call.1} parent=1 // pred_region
      %s13 = ssub.s32 256, 256
      %14 = vsyncadd [#allocation3], %s13
      %s15 = sshll.u32 [#allocation2], 4
      %s16 = int_to_ptr.vmem [resolvable:$true] %s15
      %21 = dma.hbm_to_vmem [thread:$0]  %s0, 256, %s16, [#allocation3], 128, 128, 8
    $region5: #{tpu_custom_call.1} parent=1 // pred_fallthru
      _
    // Predicated region
    $region6: #{tpu_custom_call.1} parent=1 // pred_check
      _
    $region7: #{tpu_custom_call.1} parent=1 // pred_check_branch
      %23 = sbr.rel (0) target = $region9
    $region8: #{tpu_custom_call.1} parent=1 // pred_region
      _
    $region9: #{tpu_custom_call.1} parent=1 // pred_fallthru
      _
    // Predicated region
    $region10: #{tpu_custom_call.1} parent=1 // pred_check
      _
    $region11: #{tpu_custom_call.1} parent=1 // pred_check_branch
      %25 = sbr.rel (0) target = $region13
    $region12: #{tpu_custom_call.1} parent=1 // pred_region
      _
    $region13: #{tpu_custom_call.1} parent=1 // pred_fallthru
      _
    // Predicated region
    $region14: #{tpu_custom_call.1} parent=1 // pred_check
      _
    $region15: #{tpu_custom_call.1} parent=1 // pred_check_branch
      %27 = sbr.rel (0) target = $region17
    $region16: #{tpu_custom_call.1} parent=1 // pred_region
      %28 = dma.done [#allocation3], 256
    $region17: #{tpu_custom_call.1} parent=1 // pred_fallthru
      _
    %v29 = vld [vmem:[%s1] sm:$0xf]
    %v30 = vld [vmem:[%s2] sm:$0xf]
    %v31 = vld [vmem:[#allocation2] sm:$0xff]
    %33 = vset.pattern.permute.xlu0 0
    %34 = vperm.xlu0 %33, %v30
    %v35 = vpop.permute.xlu0 %34
    %v37 = vunpack.c.l.s4 839922192
    %v38 = vunpack.c.0.s8 %v37
    %v39 = vlaneseq
    %v40 = vshrl.u32 %v39, 7
    %v41 = vsub.s32 %v38, %v40
    %v42 = vrot.slane %v35, %v41
    %v44 = vadd.f32 %v31, %v42
    %46 = vset.pattern.permute.xlu0 0
    %47 = vperm.xlu0 %46, %v29
    %v48 = vpop.permute.xlu0 %47
    %v51 = vlaneseq
    %v52 = vshrl.u32 %v51, 7
    %v53 = vsub.s32 0, %v52
    %v54 = vrot.slane %v31, %v53
    %v55 = vlaneseq
    %v56 = vshrl.u32 %v55, 7
    %v57 = vsub.s32 4, %v56
    %v58 = vrot.slane %v31, %v57
    %v61 = vlaneseq
    %v62 = vshrl.u32 %v61, 7
    %v63 = vsub.s32 0, %v62
    %v64 = vrot.slane %v54, %v63
    %v65 = vlaneseq
    %v66 = vshrl.u32 %v65, 7
    %v67 = vsub.s32 0, %v66
    %v68 = vrot.slane %v58, %v67
    %v69 = vmul.f32 %v48, %v64
    %v70 = vmul.f32 %v48, %v68
    %v73 = vcombine.low %v69, %v70
    %v75 = vadd.f32 %v44, %v73
    %76 = vset.pattern.permute.xlu0 1
    %77 = vperm.xlu0 %76, %v29
    %v78 = vpop.permute.xlu0 %77
    %v80 = vlaneseq
    %v81 = vshrl.u32 %v80, 7
    %v82 = vsub.s32 1, %v81
    %v83 = vrot.slane %v31, %v82
    %v84 = vlaneseq
    %v85 = vshrl.u32 %v84, 7
    %v86 = vsub.s32 5, %v85
    %v87 = vrot.slane %v31, %v86
    %v90 = vlaneseq
    %v91 = vshrl.u32 %v90, 7
    %v92 = vsub.s32 1, %v91
    %v93 = vrot.slane %v83, %v92
    %v94 = vlaneseq
    %v95 = vshrl.u32 %v94, 7
    %v96 = vsub.s32 1, %v95
    %v97 = vrot.slane %v87, %v96
    %v98 = vmul.f32 %v78, %v93
    %v99 = vmul.f32 %v78, %v97
    %v102 = vcombine.low %v98, %v99
    %v104 = vadd.f32 %v75, %v102
    %105 = vset.pattern.permute.xlu0 2
    %106 = vperm.xlu0 %105, %v29
    %v107 = vpop.permute.xlu0 %106
    %v109 = vlaneseq
    %v110 = vshrl.u32 %v109, 7
    %v111 = vsub.s32 2, %v110
    %v112 = vrot.slane %v31, %v111
    %v113 = vlaneseq
    %v114 = vshrl.u32 %v113, 7
    %v115 = vsub.s32 6, %v114
    %v116 = vrot.slane %v31, %v115
    %v119 = vlaneseq
    %v120 = vshrl.u32 %v119, 7
    %v121 = vsub.s32 2, %v120
    %v122 = vrot.slane %v112, %v121
    %v123 = vlaneseq
    %v124 = vshrl.u32 %v123, 7
    %v125 = vsub.s32 2, %v124
    %v126 = vrot.slane %v116, %v125
    %v127 = vmul.f32 %v107, %v122
    %v128 = vmul.f32 %v107, %v126
    %v131 = vcombine.low %v127, %v128
    %v133 = vadd.f32 %v104, %v131
    %134 = vset.pattern.permute.xlu0 3
    %135 = vperm.xlu0 %134, %v29
    %v136 = vpop.permute.xlu0 %135
    %v138 = vlaneseq
    %v139 = vshrl.u32 %v138, 7
    %v140 = vsub.s32 3, %v139
    %v141 = vrot.slane %v31, %v140
    %v142 = vlaneseq
    %v143 = vshrl.u32 %v142, 7
    %v144 = vsub.s32 7, %v143
    %v145 = vrot.slane %v31, %v144
    %v148 = vlaneseq
    %v149 = vshrl.u32 %v148, 7
    %v150 = vsub.s32 3, %v149
    %v151 = vrot.slane %v141, %v150
    %v152 = vlaneseq
    %v153 = vshrl.u32 %v152, 7
    %v154 = vsub.s32 3, %v153
    %v155 = vrot.slane %v145, %v154
    %v156 = vmul.f32 %v136, %v151
    %v157 = vmul.f32 %v136, %v155
    %v160 = vcombine.low %v156, %v157
    %v162 = vadd.f32 %v133, %v160
    %163 = vst [vmem:[#allocation5] sm:$0xff] %v162
    %s164 = scalar_lea.vmem [#allocation2], 8
    %v165 = vld [vmem:[%s164] sm:$0xff]
    %v166 = vadd.f32 %v165, %v42
    %v168 = vlaneseq
    %v169 = vshrl.u32 %v168, 7
    %v170 = vsub.s32 0, %v169
    %v171 = vrot.slane %v165, %v170
    %v172 = vlaneseq
    %v173 = vshrl.u32 %v172, 7
    %v174 = vsub.s32 4, %v173
    %v175 = vrot.slane %v165, %v174
    %v178 = vlaneseq
    %v179 = vshrl.u32 %v178, 7
    %v180 = vsub.s32 0, %v179
    %v181 = vrot.slane %v171, %v180
    %v182 = vlaneseq
    %v183 = vshrl.u32 %v182, 7
    %v184 = vsub.s32 0, %v183
    %v185 = vrot.slane %v175, %v184
    %v186 = vmul.f32 %v48, %v181
    %v187 = vmul.f32 %v48, %v185
    %v190 = vcombine.low %v186, %v187
    %v192 = vadd.f32 %v166, %v190
    %v193 = vlaneseq
    %v194 = vshrl.u32 %v193, 7
    %v195 = vsub.s32 1, %v194
    %v196 = vrot.slane %v165, %v195
    %v197 = vlaneseq
    %v198 = vshrl.u32 %v197, 7
    %v199 = vsub.s32 5, %v198
    %v200 = vrot.slane %v165, %v199
    %v203 = vlaneseq
    %v204 = vshrl.u32 %v203, 7
    %v205 = vsub.s32 1, %v204
    %v206 = vrot.slane %v196, %v205
    %v207 = vlaneseq
    %v208 = vshrl.u32 %v207, 7
    %v209 = vsub.s32 1, %v208
    %v210 = vrot.slane %v200, %v209
    %v211 = vmul.f32 %v78, %v206
    %v212 = vmul.f32 %v78, %v210
    %v215 = vcombine.low %v211, %v212
    %v217 = vadd.f32 %v192, %v215
    %v218 = vlaneseq
    %v219 = vshrl.u32 %v218, 7
    %v220 = vsub.s32 2, %v219
    %v221 = vrot.slane %v165, %v220
    %v222 = vlaneseq
    %v223 = vshrl.u32 %v222, 7
    %v224 = vsub.s32 6, %v223
    %v225 = vrot.slane %v165, %v224
    %v228 = vlaneseq
    %v229 = vshrl.u32 %v228, 7
    %v230 = vsub.s32 2, %v229
    %v231 = vrot.slane %v221, %v230
    %v232 = vlaneseq
    %v233 = vshrl.u32 %v232, 7
    %v234 = vsub.s32 2, %v233
    %v235 = vrot.slane %v225, %v234
    %v236 = vmul.f32 %v107, %v231
    %v237 = vmul.f32 %v107, %v235
    %v240 = vcombine.low %v236, %v237
    %v242 = vadd.f32 %v217, %v240
    %v243 = vlaneseq
    %v244 = vshrl.u32 %v243, 7
    %v245 = vsub.s32 3, %v244
    %v246 = vrot.slane %v165, %v245
    %v247 = vlaneseq
    %v248 = vshrl.u32 %v247, 7
    %v249 = vsub.s32 7, %v248
    %v250 = vrot.slane %v165, %v249
    %v253 = vlaneseq
    %v254 = vshrl.u32 %v253, 7
    %v255 = vsub.s32 3, %v254
    %v256 = vrot.slane %v246, %v255
    %v257 = vlaneseq
    %v258 = vshrl.u32 %v257, 7
    %v259 = vsub.s32 3, %v258
    %v260 = vrot.slane %v250, %v259
    %v261 = vmul.f32 %v136, %v256
    %v262 = vmul.f32 %v136, %v260
    %v265 = vcombine.low %v261, %v262
    %v267 = vadd.f32 %v242, %v265
    %s268 = scalar_lea.vmem [#allocation5], 8
    %269 = vst [vmem:[%s268] sm:$0xff] %v267
    // Predicated region
    $region18: #{tpu_custom_call.1} parent=1 // pred_check
      _
    $region19: #{tpu_custom_call.1} parent=1 // pred_check_branch
      %271 = sbr.rel (0) target = $region21
    $region20: #{tpu_custom_call.1} parent=1 // pred_region
      %s273 = ssub.s32 256, 256
      %274 = vsyncadd [#allocation4], %s273
      %s275 = sshll.u32 [#allocation5], 4
      %s276 = int_to_ptr.vmem [resolvable:$true] %s275
      %281 = dma.vmem_to_hbm [thread:$0]  %s276, 256, %s3, [#allocation4], 128, 128, 8
    $region21: #{tpu_custom_call.1} parent=1 // pred_fallthru
      _
    // Predicated region
    $region22: #{tpu_custom_call.1} parent=1 // pred_check
      _
    $region23: #{tpu_custom_call.1} parent=1 // pred_check_branch
      %283 = sbr.rel (0) target = $region25
    $region24: #{tpu_custom_call.1} parent=1 // pred_region
      %284 = dma.done [#allocation4], 256
    $region25: #{tpu_custom_call.1} parent=1 // pred_fallthru
      _
    %285 = vsyncpa [#allocation3], 1
    %286 = vsyncpa [#allocation4], 1

</llo_original>
